<compile_context>
chip_gen: v5e
topology: v5e:2x2
jax: 0.10.0
libtpu: 0.0.40
codegen_flags: <defaults>
</compile_context>

<pallas_src>
import math

import jax
import jax.numpy as jnp
from jax.experimental import pallas as pl
from jax.experimental.pallas import tpu as pltpu


def _round_up(x, m):
    return ((x + m - 1) // m) * m


# ------------- gate kernel: W = tanh(W_hat) * sigmoid(M_hat) ----------------

def _gate_kernel(w_hat_ref, m_hat_ref, w_ref):
    w_hat = w_hat_ref[...].astype(jnp.float32)
    m_hat = m_hat_ref[...].astype(jnp.float32)
    w = jnp.tanh(w_hat) * jax.nn.sigmoid(m_hat)      # f32 on EUP/VPU
    w_ref[...] = w.astype(w_ref.dtype)


def _gated_weight(w_hat_p, m_hat_p, mxu_dtype):
    """Compute gated weight (n_pad, k_pad) once per call (batch-independent)."""
    n_pad, k_pad = w_hat_p.shape
    out_shape = jax.ShapeDtypeStruct((n_pad, k_pad), mxu_dtype)

    if n_pad * k_pad * 4 <= 4 * 1024 * 1024:
        # Small weights: single block, no grid, whole arrays resident in VMEM.
        return pl.pallas_call(
            _gate_kernel,
            out_shape=out_shape,
            in_specs=[pl.BlockSpec(memory_space=pltpu.MemorySpace.VMEM)] * 2,
            out_specs=pl.BlockSpec(memory_space=pltpu.MemorySpace.VMEM),
        )(w_hat_p, m_hat_p)

    # Large weights: tile over the out_dim rows (128 always divides n_pad).
    tile_n = 128
    spec = pl.BlockSpec((tile_n, k_pad), lambda n: (n, 0))
    return pl.pallas_call(
        _gate_kernel,
        out_shape=out_shape,
        grid=(n_pad // tile_n,),
        in_specs=[spec, spec],
        out_specs=spec,
        compiler_params=pltpu.CompilerParams(
            dimension_semantics=("parallel",)),
    )(w_hat_p, m_hat_p)


# ------------------------- matmul: out = x @ W.T ----------------------------

def _matmul_single_kernel(x_ref, w_ref, o_ref):
    # Contract last dim of both operands (no transpose): out[b,n] = sum_k x[b,k]*w[n,k]
    x = x_ref[...].astype(w_ref.dtype)
    out = jax.lax.dot_general(
        x, w_ref[...],
        dimension_numbers=(((1,), (1,)), ((), ())),
        preferred_element_type=jnp.float32)
    o_ref[...] = out.astype(o_ref.dtype)


def _matmul_tiled_kernel(x_ref, w_ref, o_ref, acc_ref):
    @pl.when(pl.program_id(2) == 0)
    def _():
        acc_ref[...] = jnp.zeros_like(acc_ref)

    x = x_ref[...].astype(w_ref.dtype)
    acc_ref[...] += jax.lax.dot_general(
        x, w_ref[...],
        dimension_numbers=(((1,), (1,)), ((), ())),
        preferred_element_type=jnp.float32)

    @pl.when(pl.program_id(2) == pl.num_programs(2) - 1)
    def _():
        o_ref[...] = acc_ref[...].astype(o_ref.dtype)


def nac_forward(x, w_hat, m_hat, *, mxu_dtype=jnp.float32,
                tile_m=128, tile_n=128, tile_k=128):
    """Single NeuralAccumulatorCell forward: x (B, in_dim) -> (B, out_dim)."""
    batch, in_dim = x.shape
    out_dim, in_dim_w = w_hat.shape
    assert in_dim_w == in_dim and m_hat.shape == (out_dim, in_dim)

    # Lane-dense padding (multiples of 128 on lane dims, 8 on sublane dims).
    k_pad = _round_up(in_dim, 128)
    n_pad = _round_up(out_dim, 128)
    tm = min(tile_m, _round_up(batch, 8))
    b_pad = _round_up(batch, tm)
    tn = min(tile_n, n_pad)
    tk = min(tile_k, k_pad)
    assert n_pad % tn == 0 and k_pad % tk == 0

    # Zero padding is numerically inert: tanh(0)*sigmoid(0) = 0.
    x_p = jnp.pad(x, ((0, b_pad - batch), (0, k_pad - in_dim)))
    w_hat_p = jnp.pad(w_hat, ((0, n_pad - out_dim), (0, k_pad - in_dim)))
    m_hat_p = jnp.pad(m_hat, ((0, n_pad - out_dim), (0, k_pad - in_dim)))

    # Gate computed once per call (amortized across all batch tiles).
    w = _gated_weight(w_hat_p, m_hat_p, mxu_dtype)       # (n_pad, k_pad)

    grid = (b_pad // tm, n_pad // tn, k_pad // tk)
    if grid == (1, 1, 1):
        # Single-block case: no grid, no double-buffering, no step overhead.
        out_p = pl.pallas_call(
            _matmul_single_kernel,
            out_shape=jax.ShapeDtypeStruct((b_pad, n_pad), x.dtype),
            in_specs=[pl.BlockSpec(memory_space=pltpu.MemorySpace.VMEM)] * 2,
            out_specs=pl.BlockSpec(memory_space=pltpu.MemorySpace.VMEM),
        )(x_p, w)
    else:
        out_p = pl.pallas_call(
            _matmul_tiled_kernel,
            out_shape=jax.ShapeDtypeStruct((b_pad, n_pad), x.dtype),
            grid=grid,
            in_specs=[
                pl.BlockSpec((tm, tk), lambda i, j, k: (i, k)),
                pl.BlockSpec((tn, tk), lambda i, j, k: (j, k)),
            ],
            out_specs=pl.BlockSpec((tm, tn), lambda i, j, k: (i, j)),
            scratch_shapes=[pltpu.VMEM((tm, tn), jnp.float32)],
            compiler_params=pltpu.CompilerParams(
                dimension_semantics=("parallel", "parallel", "arbitrary")),
        )(x_p, w)

    return out_p[:batch, :out_dim]


# ------------------------------ reference -----------------------------------

def kaiming_uniform(key, shape):
    # Mirrors torch.nn.init.kaiming_uniform_ defaults: a=0, fan_in mode,
    # gain = sqrt(2), bound = gain * sqrt(3 / fan_in).
    fan_in = shape[1]
    bound = math.sqrt(2.0) * math.sqrt(3.0 / fan_in)
    return jax.random.uniform(key, shape, jnp.float32, -bound, bound)


def nac_reference(x, w_hat, m_hat):
    w = jnp.tanh(w_hat) * jax.nn.sigmoid(m_hat)
    return x @ w.T


if __name__ == "__main__":
    # NAC(num_layers=* -> forced to 1, in_dim=32, hidden_dim=64, out_dim=16)
    in_dim, out_dim = 32, 16
    batch = 8

    key = jax.random.PRNGKey(0)
    k_x, k_w, k_m = jax.random.split(key, 3)
    x = jax.random.normal(k_x, (batch, in_dim), jnp.float32)
    w_hat = kaiming_uniform(k_w, (out_dim, in_dim))
    m_hat = kaiming_uniform(k_m, (out_dim, in_dim))

    ref = nac_reference(x, w_hat, m_hat)

    # f32 MXU path (matches reference tightly).
    out = jax.block_until_ready(nac_forward(x, w_hat, m_hat))
    assert out.shape == (batch, out_dim)
    assert jnp.allclose(out, ref, atol=1e-5, rtol=1e-5), "f32 mismatch vs reference"

    # bf16 MXU feed (v6e/v7x fast path), f32 accumulation, f32 gate math.
    out_bf16 = jax.block_until_ready(
        nac_forward(x, w_hat, m_hat, mxu_dtype=jnp.bfloat16))
    assert jnp.allclose(out_bf16, ref, atol=5e-2, rtol=5e-2), "bf16 mismatch vs reference"

    # Exercise the tiled (i, j, k) grid path at a production-ish shape.
    key2 = jax.random.PRNGKey(1)
    k_x2, k_w2, k_m2 = jax.random.split(key2, 3)
    B2, IN2, OUT2 = 256, 384, 256
    x2 = jax.random.normal(k_x2, (B2, IN2), jnp.float32)
    w_hat2 = kaiming_uniform(k_w2, (OUT2, IN2))
    m_hat2 = kaiming_uniform(k_m2, (OUT2, IN2))
    out2 = jax.block_until_ready(
        nac_forward(x2, w_hat2, m_hat2, mxu_dtype=jnp.bfloat16))
    ref2 = nac_reference(x2, w_hat2, m_hat2)
    assert out2.shape == (B2, OUT2)
    assert jnp.allclose(out2, ref2, atol=1e-1, rtol=1e-1), "tiled path mismatch"

    print("KERNEL_OK")
</pallas_src>

<mosaic_0001>
module attributes {stable_mosaic.version = 11 : i64} {
  func.func @_gate_kernel(%arg0: memref<128x128xf32, #tpu.memory_space<vmem>>, %arg1: memref<128x128xf32, #tpu.memory_space<vmem>>, %arg2: memref<128x128xf32, #tpu.memory_space<vmem>>) attributes {dimension_semantics = [], scalar_prefetch = 0 : i64, scratch_operands = 0 : i64, tpu.core_type = #tpu.core_type<tc>} {
    %c0 = arith.constant 0 : index
    %c0_0 = arith.constant 0 : index
    %0 = vector.load %arg0[%c0, %c0_0] : memref<128x128xf32, #tpu.memory_space<vmem>>, vector<128x128xf32>
    %c0_1 = arith.constant 0 : index
    %c0_2 = arith.constant 0 : index
    %1 = vector.load %arg1[%c0_1, %c0_2] : memref<128x128xf32, #tpu.memory_space<vmem>>, vector<128x128xf32>
    %2 = math.tanh %0 : vector<128x128xf32>
    %3 = arith.negf %1 : vector<128x128xf32>
    %4 = math.exp %3 : vector<128x128xf32>
    %cst = arith.constant 1.000000e+00 : f32
    %5 = vector.broadcast %cst : f32 to vector<128x128xf32>
    %6 = arith.addf %5, %4 : vector<128x128xf32>
    %7 = arith.divf %5, %6 : vector<128x128xf32>
    %8 = arith.mulf %2, %7 : vector<128x128xf32>
    %c0_3 = arith.constant 0 : index
    %c0_4 = arith.constant 0 : index
    %9 = vector.load %arg2[%c0_3, %c0_4] : memref<128x128xf32, #tpu.memory_space<vmem>>, vector<128x128xf32>
    tpu.vector_store %arg2[%c0_3, %c0_4], %8 {strides = array<i32>} : memref<128x128xf32, #tpu.memory_space<vmem>>, vector<128x128xf32>,
    return
  }
}

</mosaic_0001>

<llo_original>
// kernel: tpu_custom_call.1
$region0: #{tpu_custom_call.1}
  #allocation0 [shape = 'u32[]', space=smem, size = 0x4, offset = 0x4, fixed_abs, tag = 'smem constant byte address 0x4 - core index']
  #allocation1 [shape = 'u32[72,128]{1,0:T(1,128)}', space=vmem, size = 0x9000, scoped, tag = 'internal scratch']
  %s0 = inlined_call_operand.hbm [shape: f32[128,128], index: 0, kind: input, shape index: {}]
  %s1 = inlined_call_operand.hbm [shape: f32[128,128], index: 1, kind: input, shape index: {}]
  %s2 = inlined_call_operand.hbm [shape: f32[128,128], index: 2, kind: output, shape index: {}]
  %s3 = sld [smem:[#allocation0]]
  $region26: #{tpu_custom_call.1} parent=0
    _
  %s5 = ssub.s32 1, %s3
  %s6 = scalar_select 0, %s5, %s3
  $region1: #{tpu_custom_call.1} parent=0
    #allocation2 [shape = 'u8[65536]{0}', space=vmem, size = 0x10000, scoped, tag = 'input window, operand 0, single buffered']
    #allocation3 [shape = 's32[1]{0}', space=sflag, size = 0x4, scoped, tag = 'scoped memory for tpu_custom_call.1']
    #allocation4 [shape = 's32[1]{0}', space=sflag, size = 0x4, scoped, tag = 'scoped memory for tpu_custom_call.1']
    #allocation5 [shape = 'u8[65536]{0}', space=vmem, size = 0x10000, scoped, tag = 'input window, operand 1, single buffered']
    #allocation6 [shape = 's32[1]{0}', space=sflag, size = 0x4, scoped, tag = 'scoped memory for tpu_custom_call.1']
    #allocation7 [shape = 'u8[65536]{0}', space=vmem, size = 0x10000, scoped, tag = 'output window, operand 0, single buffered']
    %7 = vsyncpa [#allocation3], 0
    %8 = vsyncpa [#allocation6], 0
    %9 = vsyncpa [#allocation4], 0
    // Predicated region
    $region2: #{tpu_custom_call.1} parent=1 // pred_check
      _
    $region3: #{tpu_custom_call.1} parent=1 // pred_check_branch
      %11 = sbr.rel (0) target = $region5
    $region4: #{tpu_custom_call.1} parent=1 // pred_region
      %13 = vsyncadd [#allocation3], 0
      %s14 = sshll.u32 %s0, 4
      %s15 = int_to_ptr.hbm [resolvable:$true] %s14
      %s16 = sshll.u32 [#allocation2], 4
      %s17 = int_to_ptr.vmem [resolvable:$true] %s16
      %22 = dma.hbm_to_vmem [thread:$0]  %s15, 2048, %s17, [#allocation3], 128, 128, 8
    $region5: #{tpu_custom_call.1} parent=1 // pred_fallthru
      _
    // Predicated region
    $region6: #{tpu_custom_call.1} parent=1 // pred_check
      _
    $region7: #{tpu_custom_call.1} parent=1 // pred_check_branch
      %24 = sbr.rel (0) target = $region9
    $region8: #{tpu_custom_call.1} parent=1 // pred_region
      %26 = vsyncadd [#allocation6], 0
      %s27 = sshll.u32 %s1, 4
      %s28 = int_to_ptr.hbm [resolvable:$true] %s27
      %s29 = sshll.u32 [#allocation5], 4
      %s30 = int_to_ptr.vmem [resolvable:$true] %s29
      %35 = dma.hbm_to_vmem [thread:$0]  %s28, 2048, %s30, [#allocation6], 128, 128, 8
    $region9: #{tpu_custom_call.1} parent=1 // pred_fallthru
      _
    // Predicated region
    $region10: #{tpu_custom_call.1} parent=1 // pred_check
      _
    $region11: #{tpu_custom_call.1} parent=1 // pred_check_branch
      %37 = sbr.rel (0) target = $region13
    $region12: #{tpu_custom_call.1} parent=1 // pred_region
      %39 = dma.done [#allocation3], 2048
    $region13: #{tpu_custom_call.1} parent=1 // pred_fallthru
      _
    // Predicated region
    $region14: #{tpu_custom_call.1} parent=1 // pred_check
      _
    $region15: #{tpu_custom_call.1} parent=1 // pred_check_branch
      %41 = sbr.rel (0) target = $region17
    $region16: #{tpu_custom_call.1} parent=1 // pred_region
      %43 = dma.done [#allocation6], 2048
    $region17: #{tpu_custom_call.1} parent=1 // pred_fallthru
      _
    %v44 = vld [vmem:[#allocation2] sm:$0xff]
    %v45 = vld [vmem:[#allocation2 + $0x8] sm:$0xff]
    %v46 = vld [vmem:[#allocation2 + $0x10] sm:$0xff]
    %v47 = vld [vmem:[#allocation2 + $0x18] sm:$0xff]
    %v48 = vld [vmem:[#allocation2 + $0x20] sm:$0xff]
    %v49 = vld [vmem:[#allocation2 + $0x28] sm:$0xff]
    %v50 = vld [vmem:[#allocation2 + $0x30] sm:$0xff]
    %v51 = vld [vmem:[#allocation2 + $0x38] sm:$0xff]
    %v52 = vld [vmem:[#allocation2 + $0x40] sm:$0xff]
    %v53 = vld [vmem:[#allocation2 + $0x48] sm:$0xff]
    %v54 = vld [vmem:[#allocation2 + $0x50] sm:$0xff]
    %v55 = vld [vmem:[#allocation2 + $0x58] sm:$0xff]
    %v56 = vld [vmem:[#allocation2 + $0x60] sm:$0xff]
    %v57 = vld [vmem:[#allocation2 + $0x68] sm:$0xff]
    %v58 = vld [vmem:[#allocation2 + $0x70] sm:$0xff]
    %v59 = vld [vmem:[#allocation2 + $0x78] sm:$0xff]
    %v60 = vld [vmem:[#allocation5] sm:$0xff]
    %v61 = vld [vmem:[#allocation5 + $0x8] sm:$0xff]
    %v62 = vld [vmem:[#allocation5 + $0x10] sm:$0xff]
    %v63 = vld [vmem:[#allocation5 + $0x18] sm:$0xff]
    %v64 = vld [vmem:[#allocation5 + $0x20] sm:$0xff]
    %v65 = vld [vmem:[#allocation5 + $0x28] sm:$0xff]
    %v66 = vld [vmem:[#allocation5 + $0x30] sm:$0xff]
    %v67 = vld [vmem:[#allocation5 + $0x38] sm:$0xff]
    %v68 = vld [vmem:[#allocation5 + $0x40] sm:$0xff]
    %v69 = vld [vmem:[#allocation5 + $0x48] sm:$0xff]
    %v70 = vld [vmem:[#allocation5 + $0x50] sm:$0xff]
    %v71 = vld [vmem:[#allocation5 + $0x58] sm:$0xff]
    %v72 = vld [vmem:[#allocation5 + $0x60] sm:$0xff]
    %v73 = vld [vmem:[#allocation5 + $0x68] sm:$0xff]
    %v74 = vld [vmem:[#allocation5 + $0x70] sm:$0xff]
    %v75 = vld [vmem:[#allocation5 + $0x78] sm:$0xff]
    %v76 = vtanh.pop %v44
    %v77 = vtanh.pop %v45
    %v78 = vtanh.pop %v46
    %v79 = vtanh.pop %v47
    %v80 = vtanh.pop %v48
    %v81 = vtanh.pop %v49
    %v82 = vtanh.pop %v50
    %v83 = vtanh.pop %v51
    %v84 = vtanh.pop %v52
    %v85 = vtanh.pop %v53
    %v86 = vtanh.pop %v54
    %v87 = vtanh.pop %v55
    %v88 = vtanh.pop %v56
    %v89 = vtanh.pop %v57
    %v90 = vtanh.pop %v58
    %v91 = vtanh.pop %v59
    %v92 = vxor.u32 %v60, 2147483648
    %v93 = vxor.u32 %v61, 2147483648
    %v94 = vxor.u32 %v62, 2147483648
    %v95 = vxor.u32 %v63, 2147483648
    %v96 = vxor.u32 %v64, 2147483648
    %v97 = vxor.u32 %v65, 2147483648
    %v98 = vxor.u32 %v66, 2147483648
    %v99 = vxor.u32 %v67, 2147483648
    %v100 = vxor.u32 %v68, 2147483648
    %v101 = vxor.u32 %v69, 2147483648
    %v102 = vxor.u32 %v70, 2147483648
    %v103 = vxor.u32 %v71, 2147483648
    %v104 = vxor.u32 %v72, 2147483648
    %v105 = vxor.u32 %v73, 2147483648
    %v106 = vxor.u32 %v74, 2147483648
    %v107 = vxor.u32 %v75, 2147483648
    %v108 = vmul.f32 %v92, 1.442695
    %v109 = vpow.pop %v108
    %v110 = vmul.f32 %v93, 1.442695
    %v111 = vpow.pop %v110
    %v112 = vmul.f32 %v94, 1.442695
    %v113 = vpow.pop %v112
    %v114 = vmul.f32 %v95, 1.442695
    %v115 = vpow.pop %v114
    %v116 = vmul.f32 %v96, 1.442695
    %v117 = vpow.pop %v116
    %v118 = vmul.f32 %v97, 1.442695
    %v119 = vpow.pop %v118
    %v120 = vmul.f32 %v98, 1.442695
    %v121 = vpow.pop %v120
    %v122 = vmul.f32 %v99, 1.442695
    %v123 = vpow.pop %v122
    %v124 = vmul.f32 %v100, 1.442695
    %v125 = vpow.pop %v124
    %v126 = vmul.f32 %v101, 1.442695
    %v127 = vpow.pop %v126
    %v128 = vmul.f32 %v102, 1.442695
    %v129 = vpow.pop %v128
    %v130 = vmul.f32 %v103, 1.442695
    %v131 = vpow.pop %v130
    %v132 = vmul.f32 %v104, 1.442695
    %v133 = vpow.pop %v132
    %v134 = vmul.f32 %v105, 1.442695
    %v135 = vpow.pop %v134
    %v136 = vmul.f32 %v106, 1.442695
    %v137 = vpow.pop %v136
    %v138 = vmul.f32 %v107, 1.442695
    %v139 = vpow.pop %v138
    %v140 = vadd.f32 %v109, 1.0
    %v141 = vadd.f32 %v111, 1.0
    %v142 = vadd.f32 %v113, 1.0
    %v143 = vadd.f32 %v115, 1.0
    %v144 = vadd.f32 %v117, 1.0
    %v145 = vadd.f32 %v119, 1.0
    %v146 = vadd.f32 %v121, 1.0
    %v147 = vadd.f32 %v123, 1.0
    %v148 = vadd.f32 %v125, 1.0
    %v149 = vadd.f32 %v127, 1.0
    %v150 = vadd.f32 %v129, 1.0
    %v151 = vadd.f32 %v131, 1.0
    %v152 = vadd.f32 %v133, 1.0
    %v153 = vadd.f32 %v135, 1.0
    %v154 = vadd.f32 %v137, 1.0
    %v155 = vadd.f32 %v139, 1.0
    %v156 = vrcp.pop %v140
    %v157 = vmul.f32 %v140, %v156
    %v158 = vsub.f32 1.0, %v157
    %v159 = vmul.f32 %v156, %v158
    %v160 = vadd.f32 %v156, %v159
    %vm161 = vweird.f32 %v140
    %vm162 = vweird.f32 %v156
    %vm163 = vmor %vm161, %vm162
    %v164 = vsel %vm163, %v156, %v160
    %v165 = vand.u32 2147483647, %v140
    %vm166 = vcmp.eq.f32.partialorder %v165, 8.507059e+37
    %v167 = vand.u32 %v140, 2147483648
    %v168 = vor.u32 1.1754944e-38, %v167
    %v169 = vsel %vm166, %v168, %v164
    %v170 = vmul.f32 1.0, %v169
    %v171 = vrcp.pop %v141
    %v172 = vmul.f32 %v141, %v171
    %v173 = vsub.f32 1.0, %v172
    %v174 = vmul.f32 %v171, %v173
    %v175 = vadd.f32 %v171, %v174
    %vm176 = vweird.f32 %v141
    %vm177 = vweird.f32 %v171
    %vm178 = vmor %vm176, %vm177
    %v179 = vsel %vm178, %v171, %v175
    %v180 = vand.u32 2147483647, %v141
    %vm181 = vcmp.eq.f32.partialorder %v180, 8.507059e+37
    %v182 = vand.u32 %v141, 2147483648
    %v183 = vor.u32 1.1754944e-38, %v182
    %v184 = vsel %vm181, %v183, %v179
    %v185 = vmul.f32 1.0, %v184
    %v186 = vrcp.pop %v142
    %v187 = vmul.f32 %v142, %v186
    %v188 = vsub.f32 1.0, %v187
    %v189 = vmul.f32 %v186, %v188
    %v190 = vadd.f32 %v186, %v189
    %vm191 = vweird.f32 %v142
    %vm192 = vweird.f32 %v186
    %vm193 = vmor %vm191, %vm192
    %v194 = vsel %vm193, %v186, %v190
    %v195 = vand.u32 2147483647, %v142
    %vm196 = vcmp.eq.f32.partialorder %v195, 8.507059e+37
    %v197 = vand.u32 %v142, 2147483648
    %v198 = vor.u32 1.1754944e-38, %v197
    %v199 = vsel %vm196, %v198, %v194
    %v200 = vmul.f32 1.0, %v199
    %v201 = vrcp.pop %v143
    %v202 = vmul.f32 %v143, %v201
    %v203 = vsub.f32 1.0, %v202
    %v204 = vmul.f32 %v201, %v203
    %v205 = vadd.f32 %v201, %v204
    %vm206 = vweird.f32 %v143
    %vm207 = vweird.f32 %v201
    %vm208 = vmor %vm206, %vm207
    %v209 = vsel %vm208, %v201, %v205
    %v210 = vand.u32 2147483647, %v143
    %vm211 = vcmp.eq.f32.partialorder %v210, 8.507059e+37
    %v212 = vand.u32 %v143, 2147483648
    %v213 = vor.u32 1.1754944e-38, %v212
    %v214 = vsel %vm211, %v213, %v209
    %v215 = vmul.f32 1.0, %v214
    %v216 = vrcp.pop %v144
    %v217 = vmul.f32 %v144, %v216
    %v218 = vsub.f32 1.0, %v217
    %v219 = vmul.f32 %v216, %v218
    %v220 = vadd.f32 %v216, %v219
    %vm221 = vweird.f32 %v144
    %vm222 = vweird.f32 %v216
    %vm223 = vmor %vm221, %vm222
    %v224 = vsel %vm223, %v216, %v220
    %v225 = vand.u32 2147483647, %v144
    %vm226 = vcmp.eq.f32.partialorder %v225, 8.507059e+37
    %v227 = vand.u32 %v144, 2147483648
    %v228 = vor.u32 1.1754944e-38, %v227
    %v229 = vsel %vm226, %v228, %v224
    %v230 = vmul.f32 1.0, %v229
    %v231 = vrcp.pop %v145
    %v232 = vmul.f32 %v145, %v231
    %v233 = vsub.f32 1.0, %v232
    %v234 = vmul.f32 %v231, %v233
    %v235 = vadd.f32 %v231, %v234
    %vm236 = vweird.f32 %v145
    %vm237 = vweird.f32 %v231
    %vm238 = vmor %vm236, %vm237
    %v239 = vsel %vm238, %v231, %v235
    %v240 = vand.u32 2147483647, %v145
    %vm241 = vcmp.eq.f32.partialorder %v240, 8.507059e+37
    %v242 = vand.u32 %v145, 2147483648
    %v243 = vor.u32 1.1754944e-38, %v242
    %v244 = vsel %vm241, %v243, %v239
    %v245 = vmul.f32 1.0, %v244
    %v246 = vrcp.pop %v146
    %v247 = vmul.f32 %v146, %v246
    %v248 = vsub.f32 1.0, %v247
    %v249 = vmul.f32 %v246, %v248
    %v250 = vadd.f32 %v246, %v249
    %vm251 = vweird.f32 %v146
    %vm252 = vweird.f32 %v246
    %vm253 = vmor %vm251, %vm252
    %v254 = vsel %vm253, %v246, %v250
    %v255 = vand.u32 2147483647, %v146
    %vm256 = vcmp.eq.f32.partialorder %v255, 8.507059e+37
    %v257 = vand.u32 %v146, 2147483648
    %v258 = vor.u32 1.1754944e-38, %v257
    %v259 = vsel %vm256, %v258, %v254
    %v260 = vmul.f32 1.0, %v259
    %v261 = vrcp.pop %v147
    %v262 = vmul.f32 %v147, %v261
    %v263 = vsub.f32 1.0, %v262
    %v264 = vmul.f32 %v261, %v263
    %v265 = vadd.f32 %v261, %v264
    %vm266 = vweird.f32 %v147
    %vm267 = vweird.f32 %v261
    %vm268 = vmor %vm266, %vm267
    %v269 = vsel %vm268, %v261, %v265
    %v270 = vand.u32 2147483647, %v147
    %vm271 = vcmp.eq.f32.partialorder %v270, 8.507059e+37
    %v272 = vand.u32 %v147, 2147483648
    %v273 = vor.u32 1.1754944e-38, %v272
    %v274 = vsel %vm271, %v273, %v269
    %v275 = vmul.f32 1.0, %v274
    %v276 = vrcp.pop %v148
    %v277 = vmul.f32 %v148, %v276
    %v278 = vsub.f32 1.0, %v277
    %v279 = vmul.f32 %v276, %v278
    %v280 = vadd.f32 %v276, %v279
    %vm281 = vweird.f32 %v148
    %vm282 = vweird.f32 %v276
    %vm283 = vmor %vm281, %vm282
    %v284 = vsel %vm283, %v276, %v280
    %v285 = vand.u32 2147483647, %v148
    %vm286 = vcmp.eq.f32.partialorder %v285, 8.507059e+37
    %v287 = vand.u32 %v148, 2147483648
    %v288 = vor.u32 1.1754944e-38, %v287
    %v289 = vsel %vm286, %v288, %v284
    %v290 = vmul.f32 1.0, %v289
    %v291 = vrcp.pop %v149
    %v292 = vmul.f32 %v149, %v291
    %v293 = vsub.f32 1.0, %v292
    %v294 = vmul.f32 %v291, %v293
    %v295 = vadd.f32 %v291, %v294
    %vm296 = vweird.f32 %v149
    %vm297 = vweird.f32 %v291
    %vm298 = vmor %vm296, %vm297
    %v299 = vsel %vm298, %v291, %v295
    %v300 = vand.u32 2147483647, %v149
    %vm301 = vcmp.eq.f32.partialorder %v300, 8.507059e+37
    %v302 = vand.u32 %v149, 2147483648
    %v303 = vor.u32 1.1754944e-38, %v302
    %v304 = vsel %vm301, %v303, %v299
    %v305 = vmul.f32 1.0, %v304
    %v306 = vrcp.pop %v150
    %v307 = vmul.f32 %v150, %v306
    %v308 = vsub.f32 1.0, %v307
    %v309 = vmul.f32 %v306, %v308
    %v310 = vadd.f32 %v306, %v309
    %vm311 = vweird.f32 %v150
    %vm312 = vweird.f32 %v306
    %vm313 = vmor %vm311, %vm312
    %v314 = vsel %vm313, %v306, %v310
    %v315 = vand.u32 2147483647, %v150
    %vm316 = vcmp.eq.f32.partialorder %v315, 8.507059e+37
    %v317 = vand.u32 %v150, 2147483648
    %v318 = vor.u32 1.1754944e-38, %v317
    %v319 = vsel %vm316, %v318, %v314
    %v320 = vmul.f32 1.0, %v319
    %v321 = vrcp.pop %v151
    %v322 = vmul.f32 %v151, %v321
    %v323 = vsub.f32 1.0, %v322
    %v324 = vmul.f32 %v321, %v323
    %v325 = vadd.f32 %v321, %v324
    %vm326 = vweird.f32 %v151
    %vm327 = vweird.f32 %v321
    %vm328 = vmor %vm326, %vm327
    %v329 = vsel %vm328, %v321, %v325
    %v330 = vand.u32 2147483647, %v151
    %vm331 = vcmp.eq.f32.partialorder %v330, 8.507059e+37
    %v332 = vand.u32 %v151, 2147483648
    %v333 = vor.u32 1.1754944e-38, %v332
    %v334 = vsel %vm331, %v333, %v329
    %v335 = vmul.f32 1.0, %v334
    %v336 = vrcp.pop %v152
    %v337 = vmul.f32 %v152, %v336
    %v338 = vsub.f32 1.0, %v337
    %v339 = vmul.f32 %v336, %v338
    %v340 = vadd.f32 %v336, %v339
    %vm341 = vweird.f32 %v152
    %vm342 = vweird.f32 %v336
    %vm343 = vmor %vm341, %vm342
    %v344 = vsel %vm343, %v336, %v340
    %v345 = vand.u32 2147483647, %v152
    %vm346 = vcmp.eq.f32.partialorder %v345, 8.507059e+37
    %v347 = vand.u32 %v152, 2147483648
    %v348 = vor.u32 1.1754944e-38, %v347
    %v349 = vsel %vm346, %v348, %v344
    %v350 = vmul.f32 1.0, %v349
    %v351 = vrcp.pop %v153
    %v352 = vmul.f32 %v153, %v351
    %v353 = vsub.f32 1.0, %v352
    %v354 = vmul.f32 %v351, %v353
    %v355 = vadd.f32 %v351, %v354
    %vm356 = vweird.f32 %v153
    %vm357 = vweird.f32 %v351
    %vm358 = vmor %vm356, %vm357
    %v359 = vsel %vm358, %v351, %v355
    %v360 = vand.u32 2147483647, %v153
    %vm361 = vcmp.eq.f32.partialorder %v360, 8.507059e+37
    %v362 = vand.u32 %v153, 2147483648
    %v363 = vor.u32 1.1754944e-38, %v362
    %v364 = vsel %vm361, %v363, %v359
    %v365 = vmul.f32 1.0, %v364
    %v366 = vrcp.pop %v154
    %v367 = vmul.f32 %v154, %v366
    %v368 = vsub.f32 1.0, %v367
    %v369 = vmul.f32 %v366, %v368
    %v370 = vadd.f32 %v366, %v369
    %vm371 = vweird.f32 %v154
    %vm372 = vweird.f32 %v366
    %vm373 = vmor %vm371, %vm372
    %v374 = vsel %vm373, %v366, %v370
    %v375 = vand.u32 2147483647, %v154
    %vm376 = vcmp.eq.f32.partialorder %v375, 8.507059e+37
    %v377 = vand.u32 %v154, 2147483648
    %v378 = vor.u32 1.1754944e-38, %v377
    %v379 = vsel %vm376, %v378, %v374
    %v380 = vmul.f32 1.0, %v379
    %v381 = vrcp.pop %v155
    %v382 = vmul.f32 %v155, %v381
    %v383 = vsub.f32 1.0, %v382
    %v384 = vmul.f32 %v381, %v383
    %v385 = vadd.f32 %v381, %v384
    %vm386 = vweird.f32 %v155
    %vm387 = vweird.f32 %v381
    %vm388 = vmor %vm386, %vm387
    %v389 = vsel %vm388, %v381, %v385
    %v390 = vand.u32 2147483647, %v155
    %vm391 = vcmp.eq.f32.partialorder %v390, 8.507059e+37
    %v392 = vand.u32 %v155, 2147483648
    %v393 = vor.u32 1.1754944e-38, %v392
    %v394 = vsel %vm391, %v393, %v389
    %v395 = vmul.f32 1.0, %v394
    %v396 = vmul.f32 %v76, %v170
    %v397 = vmul.f32 %v77, %v185
    %v398 = vmul.f32 %v78, %v200
    %v399 = vmul.f32 %v79, %v215
    %v400 = vmul.f32 %v80, %v230
    %v401 = vmul.f32 %v81, %v245
    %v402 = vmul.f32 %v82, %v260
    %v403 = vmul.f32 %v83, %v275
    %v404 = vmul.f32 %v84, %v290
    %v405 = vmul.f32 %v85, %v305
    %v406 = vmul.f32 %v86, %v320
    %v407 = vmul.f32 %v87, %v335
    %v408 = vmul.f32 %v88, %v350
    %v409 = vmul.f32 %v89, %v365
    %v410 = vmul.f32 %v90, %v380
    %v411 = vmul.f32 %v91, %v395
    %412 = vst [vmem:[#allocation7] sm:$0xff] %v396
    %413 = vst [vmem:[#allocation7 + $0x8] sm:$0xff] %v397
    %414 = vst [vmem:[#allocation7 + $0x10] sm:$0xff] %v398
    %415 = vst [vmem:[#allocation7 + $0x18] sm:$0xff] %v399
    %416 = vst [vmem:[#allocation7 + $0x20] sm:$0xff] %v400
    %417 = vst [vmem:[#allocation7 + $0x28] sm:$0xff] %v401
    %418 = vst [vmem:[#allocation7 + $0x30] sm:$0xff] %v402
    %419 = vst [vmem:[#allocation7 + $0x38] sm:$0xff] %v403
    %420 = vst [vmem:[#allocation7 + $0x40] sm:$0xff] %v404
    %421 = vst [vmem:[#allocation7 + $0x48] sm:$0xff] %v405
    %422 = vst [vmem:[#allocation7 + $0x50] sm:$0xff] %v406
    %423 = vst [vmem:[#allocation7 + $0x58] sm:$0xff] %v407
    %424 = vst [vmem:[#allocation7 + $0x60] sm:$0xff] %v408
    %425 = vst [vmem:[#allocation7 + $0x68] sm:$0xff] %v409
    %426 = vst [vmem:[#allocation7 + $0x70] sm:$0xff] %v410
    %427 = vst [vmem:[#allocation7 + $0x78] sm:$0xff] %v411
    // Predicated region
    $region18: #{tpu_custom_call.1} parent=1 // pred_check
      _
    $region19: #{tpu_custom_call.1} parent=1 // pred_check_branch
      %429 = sbr.rel (0) target = $region21
    $region20: #{tpu_custom_call.1} parent=1 // pred_region
      %431 = vsyncadd [#allocation4], 0
      %s432 = sshll.u32 [#allocation7], 4
      %s433 = int_to_ptr.vmem [resolvable:$true] %s432
      %s434 = sshll.u32 %s2, 4
      %s435 = int_to_ptr.hbm [resolvable:$true] %s434
      %440 = dma.vmem_to_hbm [thread:$0]  %s433, 2048, %s435, [#allocation4], 128, 128, 8
    $region21: #{tpu_custom_call.1} parent=1 // pred_fallthru
      _
    // Predicated region
    $region22: #{tpu_custom_call.1} parent=1 // pred_check
      _
    $region23: #{tpu_custom_call.1} parent=1 // pred_check_branch
      %442 = sbr.rel (0) target = $region25
    $region24: #{tpu_custom_call.1} parent=1 // pred_region
      %444 = dma.done [#allocation4], 2048
    $region25: #{tpu_custom_call.1} parent=1 // pred_fallthru
      _
    %445 = vsyncpa [#allocation3], 1
    %446 = vsyncpa [#allocation6], 1
    %447 = vsyncpa [#allocation4], 1

</llo_original>
